<compile_context>
chip_gen: v7x
topology: tpu7x:2x2x1
jax: 0.10.0
libtpu: 0.0.40
codegen_flags: <defaults>
</compile_context>

<pallas_src>
import functools

import jax
import jax.numpy as jnp
from jax import lax
from jax.experimental import pallas as pl
from jax.experimental.pallas import tpu as pltpu

_LANE = 128


def _knn_kernel(s_ref, q_ref, q2_ref, val_ref, idx_ref, *, k_neighbors, idx_bits):
    # s_ref : (1, C+1, N)  channel-major support, rows = [-2*x_c ..., |x|^2]
    # q_ref : (1, C+1, TM) channel-major query tile, last row = ones
    # q2_ref: (1, 1, TM)   query squared norms (f32)
    # val_ref / idx_ref: (1, K, TM) output blocks (lane-dense)
    s_aug = s_ref[0]                                   # [C+1, N] native dtype
    q_aug = q_ref[0]                                   # [C+1, TM] native dtype
    q2 = q2_ref[0]                                     # [1, TM] f32
    n = s_aug.shape[1]

    # Single MXU matmul (norm-folded): part[n, m] = |s_n|^2 - 2 <s_n, q_m>.
    part = lax.dot_general(
        s_aug, q_aug, (((0,), (0,)), ((), ())),
        preferred_element_type=jnp.float32)            # [N, TM]
    # Squared distances; clamp so the int32 bit pattern orders monotonically.
    d2 = jnp.maximum(part + q2, 0.0)                   # [N, TM]

    # Pack truncated d2 bits (high) + support index (low idx_bits) into one
    # int32 sort key: one min per round gives the exact index; the exact value
    # is re-selected through the same hit mask (no truncation bias).
    mask = (1 << idx_bits) - 1
    lo_mask = jnp.int32(mask)
    hi_mask = jnp.int32(~mask)
    iota_col = lax.broadcasted_iota(jnp.int32, (n, 1), 0)        # [N, 1]
    packed = (pltpu.bitcast(d2, jnp.int32) & hi_mask) | iota_col  # lane-bcast

    sentinel = jnp.int32(0x7FFFFFFF)
    inf = jnp.float32(jnp.inf)
    for kk in range(k_neighbors):                      # K static & small
        key = jnp.min(packed, axis=0)                  # [TM] single XLU reduce
        hit = packed == key[None, :]                   # exactly one hit/column
        d2_win = jnp.min(jnp.where(hit, d2, inf), axis=0)   # exact winner d2
        # Direct per-round stores: no live list of 2K vectors, no jnp.stack.
        idx_ref[0, kk, :] = key & lo_mask
        val_ref[0, kk, :] = jnp.sqrt(d2_win)           # sqrt only on winners
        if kk + 1 < k_neighbors:
            packed = jnp.where(hit, sentinel, packed)


def _pick_query_tile(n_support, m_padded, tm_max):
    """Generation-aware query-tile width and VMEM limit."""
    try:
        vmem_cap = int(pltpu.get_tpu_info().vmem_capacity_bytes)
    except Exception:  # interpret mode / API drift: assume 128 MiB class
        vmem_cap = 128 * 1024 * 1024
    # v5e/v6e (128 MiB) -> 64 MiB scoped request; v7x (64 MiB) -> 32 MiB.
    vmem_limit = min(vmem_cap // 2, 64 * 1024 * 1024)
    # Live per-step intermediates ~= 4 x [N, TM] 32-bit tiles
    # (part / d2 / packed / hit); keep under half the scoped limit so the
    # (small, lane-dense) double-buffered inputs/outputs still fit.
    budget = vmem_limit // 2
    per_lane = 4 * n_support * 4
    tm_cap = max(_LANE, (budget // per_lane) // _LANE * _LANE)
    tm = min(tm_max, tm_cap, m_padded)
    tm = max(_LANE, (tm // _LANE) * _LANE)
    while m_padded % tm:
        tm -= _LANE
    return tm, vmem_limit


def knn(support, query, neighbors, *, tm_max=1024):
    """support: [B,N,C], query: [B,M,C] -> (values [B,K,M] f32, idx [B,M,K] i32)."""
    B, N, C = support.shape
    Bq, M, Cq = query.shape
    assert B == Bq and C == Cq
    K = neighbors
    assert 1 <= K <= N, "neighbors must satisfy 1 <= K <= N (as torch.topk)"
    assert N <= (1 << 24), "support too large for packed int32 keys"

    # bf16 feeds the MXU directly; everything else is matmul'd in f32.
    mm_dtype = support.dtype if support.dtype == jnp.bfloat16 else jnp.float32

    # --- wrapper-side layout plumbing (lane-dense support, MXU-folded norms) ---
    s_cm = jnp.transpose(support, (0, 2, 1)).astype(jnp.float32)       # [B, C, N]
    s2 = jnp.sum(jnp.square(s_cm), axis=1, keepdims=True)              # [B, 1, N]
    s_aug = jnp.concatenate([-2.0 * s_cm, s2], axis=1).astype(mm_dtype)  # [B, C+1, N]

    q_cm = jnp.transpose(query, (0, 2, 1)).astype(jnp.float32)         # [B, C, M]
    q2 = jnp.sum(jnp.square(q_cm), axis=1, keepdims=True)              # [B, 1, M]
    q_aug = jnp.concatenate(
        [q_cm, jnp.ones((B, 1, M), jnp.float32)], axis=1).astype(mm_dtype)

    # Pad the query axis to a lane-dense multiple of 128 (sliced off below).
    M_pad = ((M + _LANE - 1) // _LANE) * _LANE
    if M_pad != M:
        pad = ((0, 0), (0, 0), (0, M_pad - M))
        q_aug = jnp.pad(q_aug, pad)
        q2 = jnp.pad(q2, pad)

    tm, vmem_limit = _pick_query_tile(N, M_pad, tm_max)
    m_tiles = M_pad // tm

    idx_bits = max(1, (N - 1).bit_length())
    kernel = functools.partial(_knn_kernel, k_neighbors=K, idx_bits=idx_bits)

    vals, idx_km = pl.pallas_call(
        kernel,
        out_shape=(
            jax.ShapeDtypeStruct((B, K, M_pad), jnp.float32),
            jax.ShapeDtypeStruct((B, K, M_pad), jnp.int32),
        ),
        grid_spec=pltpu.PrefetchScalarGridSpec(
            num_scalar_prefetch=0,
            # m innermost: support block index never changes across steps,
            # so Pallas keeps the (lane-dense) support slab resident.
            grid=(B, m_tiles),
            in_specs=[
                pl.BlockSpec((1, C + 1, N), lambda b, m: (b, 0, 0)),    # support
                pl.BlockSpec((1, C + 1, tm), lambda b, m: (b, 0, m)),   # query tile
                pl.BlockSpec((1, 1, tm), lambda b, m: (b, 0, m)),       # |q|^2
            ],
            out_specs=[
                pl.BlockSpec((1, K, tm), lambda b, m: (b, 0, m)),       # values
                pl.BlockSpec((1, K, tm), lambda b, m: (b, 0, m)),       # indices
            ],
        ),
        compiler_params=pltpu.CompilerParams(
            dimension_semantics=("parallel", "parallel"),
            vmem_limit_bytes=vmem_limit,
        ),
    )(s_aug, q_aug, q2)

    # Match torch: values [B, K, M]; indices [B, M, K] int32.
    vals = vals[:, :, :M]
    idx = jnp.transpose(idx_km[:, :, :M], (0, 2, 1))
    return vals, idx


def _knn_reference(support, query, neighbors):
    # Pure-JAX reference mirroring torch.cdist + topk(dim=1, largest=False).
    diff = support[:, :, None, :] - query[:, None, :, :]       # [B, N, M, C]
    dist = jnp.sqrt(jnp.sum(diff * diff, axis=-1))              # [B, N, M]
    order = jnp.argsort(dist, axis=1)[:, :neighbors, :]         # [B, K, M]
    vals = jnp.take_along_axis(dist, order, axis=1)             # [B, K, M]
    idx = jnp.transpose(order, (0, 2, 1)).astype(jnp.int32)     # [B, M, K]
    return dist, vals, idx


if __name__ == "__main__":
    B, N, M, C, K = 2, 16, 8, 4, 4

    key = jax.random.PRNGKey(0)
    ks, kq = jax.random.split(key)
    support = jax.random.normal(ks, (B, N, C), dtype=jnp.float32)
    query = jax.random.normal(kq, (B, M, C), dtype=jnp.float32)

    vals, idx = knn(support, query, K)
    jax.block_until_ready((vals, idx))

    dist_ref, ref_vals, ref_idx = _knn_reference(support, query, K)
    assert vals.shape == (B, K, M) and vals.dtype == jnp.float32
    assert idx.shape == (B, M, K) and idx.dtype == jnp.int32
    assert jnp.allclose(vals, ref_vals, atol=1e-4), "values mismatch"
    # Validate indices by the distances they select (robust to exact ties /
    # float-rounding near-ties where argsort order is not unique).
    sel = jnp.take_along_axis(dist_ref, jnp.transpose(idx, (0, 2, 1)), axis=1)
    assert jnp.allclose(sel, ref_vals, atol=1e-4), "indices select wrong neighbors"

    print("KERNEL_OK")
</pallas_src>

<mosaic_0001>
module attributes {stable_mosaic.version = 11 : i64} {
  func.func @_knn_kernel(%arg0: i32, %arg1: i32, %arg2: memref<1x5x16xf32, #tpu.memory_space<vmem>>, %arg3: memref<1x5x128xf32, #tpu.memory_space<vmem>>, %arg4: memref<1x1x128xf32, #tpu.memory_space<vmem>>, %arg5: memref<1x4x128xf32, #tpu.memory_space<vmem>>, %arg6: memref<1x4x128xi32, #tpu.memory_space<vmem>>) attributes {dimension_semantics = [#tpu.dimension_semantics<parallel>, #tpu.dimension_semantics<parallel>], iteration_bounds = array<i64: 2, 1>, scalar_prefetch = 0 : i64, scratch_operands = 0 : i64, tpu.core_type = #tpu.core_type<tc>, window_params = [{transform_indices = @transform_0, window_bounds = array<i64: 1, 5, 16>}, {transform_indices = @transform_1, window_bounds = array<i64: 1, 5, 128>}, {transform_indices = @transform_2, window_bounds = array<i64: 1, 1, 128>}, {transform_indices = @transform_3, window_bounds = array<i64: 1, 4, 128>}, {transform_indices = @transform_4, window_bounds = array<i64: 1, 4, 128>}]} {
    %c0 = arith.constant 0 : index
    %c0_0 = arith.constant 0 : index
    %c0_1 = arith.constant 0 : index
    %0 = vector.load %arg2[%c0, %c0_0, %c0_1] : memref<1x5x16xf32, #tpu.memory_space<vmem>>, vector<1x5x16xf32>
    %1 = vector.shape_cast %0 : vector<1x5x16xf32> to vector<5x16xf32>
    %c0_2 = arith.constant 0 : index
    %c0_3 = arith.constant 0 : index
    %c0_4 = arith.constant 0 : index
    %2 = vector.load %arg3[%c0_2, %c0_3, %c0_4] : memref<1x5x128xf32, #tpu.memory_space<vmem>>, vector<1x5x128xf32>
    %3 = vector.shape_cast %2 : vector<1x5x128xf32> to vector<5x128xf32>
    %c0_5 = arith.constant 0 : index
    %c0_6 = arith.constant 0 : index
    %c0_7 = arith.constant 0 : index
    %4 = vector.load %arg4[%c0_5, %c0_6, %c0_7] : memref<1x1x128xf32, #tpu.memory_space<vmem>>, vector<1x1x128xf32>
    %5 = vector.shape_cast %4 : vector<1x1x128xf32> to vector<1x128xf32>
    %cst = arith.constant dense<0.000000e+00> : vector<16x128xf32>
    %6 = tpu.matmul %1, %3, %cst {dimension_numbers = #tpu.dot_dimension_numbers<[0], [0], [1], [1], [0, 1, 1, 1], [], []>} : vector<5x16xf32>, vector<5x128xf32>, vector<16x128xf32> -> vector<16x128xf32>
    %7 = vector.broadcast %5 : vector<1x128xf32> to vector<16x128xf32>
    %8 = arith.addf %6, %7 : vector<16x128xf32>
    %cst_8 = arith.constant 0.000000e+00 : f32
    %9 = vector.broadcast %cst_8 : f32 to vector<16x128xf32>
    %10 = arith.maximumf %8, %9 : vector<16x128xf32>
    %11 = tpu.iota {dimensions = array<i32: 0>} : vector<16x1xi32>
    %12 = tpu.bitcast %10 : vector<16x128xf32> -> vector<16x128xi32>
    %c-16_i32 = arith.constant -16 : i32
    %13 = vector.broadcast %c-16_i32 : i32 to vector<16x128xi32>
    %14 = arith.andi %12, %13 : vector<16x128xi32>
    %15 = vector.broadcast %11 : vector<16x1xi32> to vector<16x128xi32>
    %16 = arith.ori %14, %15 : vector<16x128xi32>
    %cst_9 = arith.constant dense<2147483647> : vector<128xi32>
    %17 = vector.multi_reduction <minsi>, %16, %cst_9 [0] : vector<16x128xi32> to vector<128xi32>
    %18 = vector.shape_cast %17 : vector<128xi32> to vector<1x128xi32>
    %19 = vector.broadcast %18 : vector<1x128xi32> to vector<16x128xi32>
    %20 = arith.cmpi eq, %16, %19 : vector<16x128xi32>
    %cst_10 = arith.constant 0x7F800000 : f32
    %21 = vector.broadcast %cst_10 : f32 to vector<16x128xf32>
    %22 = arith.select %20, %10, %21 : vector<16x128xi1>, vector<16x128xf32>
    %cst_11 = arith.constant dense<0x7F800000> : vector<128xf32>
    %23 = vector.multi_reduction <minimumf>, %22, %cst_11 [0] : vector<16x128xf32> to vector<128xf32>
    %c15_i32 = arith.constant 15 : i32
    %24 = vector.broadcast %c15_i32 : i32 to vector<128xi32>
    %25 = arith.andi %17, %24 : vector<128xi32>
    %c0_12 = arith.constant 0 : index
    %c0_13 = arith.constant 0 : index
    %c0_14 = arith.constant 0 : index
    %26 = vector.load %arg6[%c0_12, %c0_13, %c0_14] : memref<1x4x128xi32, #tpu.memory_space<vmem>>, vector<1x1x128xi32>
    %27 = vector.shape_cast %26 : vector<1x1x128xi32> to vector<128xi32>
    %28 = vector.shape_cast %25 : vector<128xi32> to vector<1x1x128xi32>
    tpu.vector_store %arg6[%c0_12, %c0_13, %c0_14], %28 {strides = array<i32>} : memref<1x4x128xi32, #tpu.memory_space<vmem>>, vector<1x1x128xi32>,
    %29 = math.sqrt %23 : vector<128xf32>
    %c0_15 = arith.constant 0 : index
    %c0_16 = arith.constant 0 : index
    %c0_17 = arith.constant 0 : index
    %30 = vector.load %arg5[%c0_15, %c0_16, %c0_17] : memref<1x4x128xf32, #tpu.memory_space<vmem>>, vector<1x1x128xf32>
    %31 = vector.shape_cast %30 : vector<1x1x128xf32> to vector<128xf32>
    %32 = vector.shape_cast %29 : vector<128xf32> to vector<1x1x128xf32>
    tpu.vector_store %arg5[%c0_15, %c0_16, %c0_17], %32 {strides = array<i32>} : memref<1x4x128xf32, #tpu.memory_space<vmem>>, vector<1x1x128xf32>,
    %c2147483647_i32 = arith.constant 2147483647 : i32
    %33 = vector.broadcast %c2147483647_i32 : i32 to vector<16x128xi32>
    %34 = arith.select %20, %33, %16 : vector<16x128xi1>, vector<16x128xi32>
    %cst_18 = arith.constant dense<2147483647> : vector<128xi32>
    %35 = vector.multi_reduction <minsi>, %34, %cst_18 [0] : vector<16x128xi32> to vector<128xi32>
    %36 = vector.shape_cast %35 : vector<128xi32> to vector<1x128xi32>
    %37 = vector.broadcast %36 : vector<1x128xi32> to vector<16x128xi32>
    %38 = arith.cmpi eq, %34, %37 : vector<16x128xi32>
    %cst_19 = arith.constant 0x7F800000 : f32
    %39 = vector.broadcast %cst_19 : f32 to vector<16x128xf32>
    %40 = arith.select %38, %10, %39 : vector<16x128xi1>, vector<16x128xf32>
    %cst_20 = arith.constant dense<0x7F800000> : vector<128xf32>
    %41 = vector.multi_reduction <minimumf>, %40, %cst_20 [0] : vector<16x128xf32> to vector<128xf32>
    %c15_i32_21 = arith.constant 15 : i32
    %42 = vector.broadcast %c15_i32_21 : i32 to vector<128xi32>
    %43 = arith.andi %35, %42 : vector<128xi32>
    %c0_22 = arith.constant 0 : index
    %c1 = arith.constant 1 : index
    %c0_23 = arith.constant 0 : index
    %44 = vector.load %arg6[%c0_22, %c1, %c0_23] : memref<1x4x128xi32, #tpu.memory_space<vmem>>, vector<1x1x128xi32>
    %45 = vector.shape_cast %44 : vector<1x1x128xi32> to vector<128xi32>
    %46 = vector.shape_cast %43 : vector<128xi32> to vector<1x1x128xi32>
    tpu.vector_store %arg6[%c0_22, %c1, %c0_23], %46 {strides = array<i32>} : memref<1x4x128xi32, #tpu.memory_space<vmem>>, vector<1x1x128xi32>,
    %47 = math.sqrt %41 : vector<128xf32>
    %c0_24 = arith.constant 0 : index
    %c1_25 = arith.constant 1 : index
    %c0_26 = arith.constant 0 : index
    %48 = vector.load %arg5[%c0_24, %c1_25, %c0_26] : memref<1x4x128xf32, #tpu.memory_space<vmem>>, vector<1x1x128xf32>
    %49 = vector.shape_cast %48 : vector<1x1x128xf32> to vector<128xf32>
    %50 = vector.shape_cast %47 : vector<128xf32> to vector<1x1x128xf32>
    tpu.vector_store %arg5[%c0_24, %c1_25, %c0_26], %50 {strides = array<i32>} : memref<1x4x128xf32, #tpu.memory_space<vmem>>, vector<1x1x128xf32>,
    %c2147483647_i32_27 = arith.constant 2147483647 : i32
    %51 = vector.broadcast %c2147483647_i32_27 : i32 to vector<16x128xi32>
    %52 = arith.select %38, %51, %34 : vector<16x128xi1>, vector<16x128xi32>
    %cst_28 = arith.constant dense<2147483647> : vector<128xi32>
    %53 = vector.multi_reduction <minsi>, %52, %cst_28 [0] : vector<16x128xi32> to vector<128xi32>
    %54 = vector.shape_cast %53 : vector<128xi32> to vector<1x128xi32>
    %55 = vector.broadcast %54 : vector<1x128xi32> to vector<16x128xi32>
    %56 = arith.cmpi eq, %52, %55 : vector<16x128xi32>
    %cst_29 = arith.constant 0x7F800000 : f32
    %57 = vector.broadcast %cst_29 : f32 to vector<16x128xf32>
    %58 = arith.select %56, %10, %57 : vector<16x128xi1>, vector<16x128xf32>
    %cst_30 = arith.constant dense<0x7F800000> : vector<128xf32>
    %59 = vector.multi_reduction <minimumf>, %58, %cst_30 [0] : vector<16x128xf32> to vector<128xf32>
    %c15_i32_31 = arith.constant 15 : i32
    %60 = vector.broadcast %c15_i32_31 : i32 to vector<128xi32>
    %61 = arith.andi %53, %60 : vector<128xi32>
    %c0_32 = arith.constant 0 : index
    %c2 = arith.constant 2 : index
    %c0_33 = arith.constant 0 : index
    %62 = vector.load %arg6[%c0_32, %c2, %c0_33] : memref<1x4x128xi32, #tpu.memory_space<vmem>>, vector<1x1x128xi32>
    %63 = vector.shape_cast %62 : vector<1x1x128xi32> to vector<128xi32>
    %64 = vector.shape_cast %61 : vector<128xi32> to vector<1x1x128xi32>
    tpu.vector_store %arg6[%c0_32, %c2, %c0_33], %64 {strides = array<i32>} : memref<1x4x128xi32, #tpu.memory_space<vmem>>, vector<1x1x128xi32>,
    %65 = math.sqrt %59 : vector<128xf32>
    %c0_34 = arith.constant 0 : index
    %c2_35 = arith.constant 2 : index
    %c0_36 = arith.constant 0 : index
    %66 = vector.load %arg5[%c0_34, %c2_35, %c0_36] : memref<1x4x128xf32, #tpu.memory_space<vmem>>, vector<1x1x128xf32>
    %67 = vector.shape_cast %66 : vector<1x1x128xf32> to vector<128xf32>
    %68 = vector.shape_cast %65 : vector<128xf32> to vector<1x1x128xf32>
    tpu.vector_store %arg5[%c0_34, %c2_35, %c0_36], %68 {strides = array<i32>} : memref<1x4x128xf32, #tpu.memory_space<vmem>>, vector<1x1x128xf32>,
    %c2147483647_i32_37 = arith.constant 2147483647 : i32
    %69 = vector.broadcast %c2147483647_i32_37 : i32 to vector<16x128xi32>
    %70 = arith.select %56, %69, %52 : vector<16x128xi1>, vector<16x128xi32>
    %cst_38 = arith.constant dense<2147483647> : vector<128xi32>
    %71 = vector.multi_reduction <minsi>, %70, %cst_38 [0] : vector<16x128xi32> to vector<128xi32>
    %72 = vector.shape_cast %71 : vector<128xi32> to vector<1x128xi32>
    %73 = vector.broadcast %72 : vector<1x128xi32> to vector<16x128xi32>
    %74 = arith.cmpi eq, %70, %73 : vector<16x128xi32>
    %cst_39 = arith.constant 0x7F800000 : f32
    %75 = vector.broadcast %cst_39 : f32 to vector<16x128xf32>
    %76 = arith.select %74, %10, %75 : vector<16x128xi1>, vector<16x128xf32>
    %cst_40 = arith.constant dense<0x7F800000> : vector<128xf32>
    %77 = vector.multi_reduction <minimumf>, %76, %cst_40 [0] : vector<16x128xf32> to vector<128xf32>
    %c15_i32_41 = arith.constant 15 : i32
    %78 = vector.broadcast %c15_i32_41 : i32 to vector<128xi32>
    %79 = arith.andi %71, %78 : vector<128xi32>
    %c0_42 = arith.constant 0 : index
    %c3 = arith.constant 3 : index
    %c0_43 = arith.constant 0 : index
    %80 = vector.load %arg6[%c0_42, %c3, %c0_43] : memref<1x4x128xi32, #tpu.memory_space<vmem>>, vector<1x1x128xi32>
    %81 = vector.shape_cast %80 : vector<1x1x128xi32> to vector<128xi32>
    %82 = vector.shape_cast %79 : vector<128xi32> to vector<1x1x128xi32>
    tpu.vector_store %arg6[%c0_42, %c3, %c0_43], %82 {strides = array<i32>} : memref<1x4x128xi32, #tpu.memory_space<vmem>>, vector<1x1x128xi32>,
    %83 = math.sqrt %77 : vector<128xf32>
    %c0_44 = arith.constant 0 : index
    %c3_45 = arith.constant 3 : index
    %c0_46 = arith.constant 0 : index
    %84 = vector.load %arg5[%c0_44, %c3_45, %c0_46] : memref<1x4x128xf32, #tpu.memory_space<vmem>>, vector<1x1x128xf32>
    %85 = vector.shape_cast %84 : vector<1x1x128xf32> to vector<128xf32>
    %86 = vector.shape_cast %83 : vector<128xf32> to vector<1x1x128xf32>
    tpu.vector_store %arg5[%c0_44, %c3_45, %c0_46], %86 {strides = array<i32>} : memref<1x4x128xf32, #tpu.memory_space<vmem>>, vector<1x1x128xf32>,
    return
  }
  func.func @transform_0(%arg0: i32, %arg1: i32) -> (i32, i32, i32) {
    %c0_i32 = arith.constant 0 : i32
    %c0_i32_0 = arith.constant 0 : i32
    %c0_i32_1 = arith.constant 0 : i32
    return %arg0, %c0_i32, %c0_i32_0 : i32, i32, i32
  }
  func.func @transform_1(%arg0: i32, %arg1: i32) -> (i32, i32, i32) {
    %c0_i32 = arith.constant 0 : i32
    %c0_i32_0 = arith.constant 0 : i32
    return %arg0, %c0_i32, %arg1 : i32, i32, i32
  }
  func.func @transform_2(%arg0: i32, %arg1: i32) -> (i32, i32, i32) {
    %c0_i32 = arith.constant 0 : i32
    %c0_i32_0 = arith.constant 0 : i32
    return %arg0, %c0_i32, %arg1 : i32, i32, i32
  }
  func.func @transform_3(%arg0: i32, %arg1: i32) -> (i32, i32, i32) {
    %c0_i32 = arith.constant 0 : i32
    %c0_i32_0 = arith.constant 0 : i32
    return %arg0, %c0_i32, %arg1 : i32, i32, i32
  }
  func.func @transform_4(%arg0: i32, %arg1: i32) -> (i32, i32, i32) {
    %c0_i32 = arith.constant 0 : i32
    %c0_i32_0 = arith.constant 0 : i32
    return %arg0, %c0_i32, %arg1 : i32, i32, i32
  }
}

</mosaic_0001>

<llo_original>
// kernel: tpu_custom_call.1
$region0: #{tpu_custom_call.1}
  #allocation0 [shape = 'u32[]', space=smem, size = 0x4, offset = 0x4, fixed_abs, tag = 'smem constant byte address 0x4 - core index']
  #allocation1 [shape = 'u32[144,128]{1,0:T(1,128)}', space=vmem, size = 0x12000, scoped, tag = 'internal scratch']
  %s0 = inlined_call_operand.hbm [shape: f32[2,5,16], index: 0, kind: input, shape index: {}]
  %s1 = inlined_call_operand.hbm [shape: f32[2,5,128], index: 1, kind: input, shape index: {}]
  %s2 = inlined_call_operand.hbm [shape: f32[2,1,128], index: 2, kind: input, shape index: {}]
  %s3 = inlined_call_operand.hbm [shape: f32[2,4,128], index: 3, kind: output, shape index: {0}]
  %s4 = inlined_call_operand.hbm [shape: s32[2,4,128], index: 4, kind: output, shape index: {1}]
  %5 = xla_tuple %s3, %s4
  %s6 = sld [smem:[#allocation0]]
  $region65: #{tpu_custom_call.1} parent=0
    _
  %s8 = ssub.s32 1, %s6
  %s9 = scalar_select 0, %s8, %s6
  $region1: #{tpu_custom_call.1} parent=0
    #allocation2 [shape = 'u8[8192]{0}', space=vmem, size = 0x2000, scoped, tag = 'input window, operand 0']
    #allocation3 [shape = 's32[2]{0}', space=sflag, size = 0x8, scoped, tag = 'scoped memory for tpu_custom_call.1']
    #allocation4 [shape = 's32[2]{0}', space=sflag, size = 0x8, scoped, tag = 'scoped memory for tpu_custom_call.1']
    #allocation5 [shape = 'u8[8192]{0}', space=vmem, size = 0x2000, scoped, tag = 'input window, operand 1']
    #allocation6 [shape = 's32[2]{0}', space=sflag, size = 0x8, scoped, tag = 'scoped memory for tpu_custom_call.1']
    #allocation7 [shape = 'u8[1024]{0}', space=vmem, size = 0x400, scoped, tag = 'input window, operand 2']
    #allocation8 [shape = 'u8[4096]{0}', space=vmem, size = 0x1000, scoped, tag = 'output window, operand 0']
    #allocation9 [shape = 'u8[4096]{0}', space=vmem, size = 0x1000, scoped, tag = 'output window, operand 1']
    #allocation10 [shape = 's32[2]{0}', space=sflag, size = 0x8, scoped, tag = 'scoped memory for tpu_custom_call.1']
    %10 = vsyncpa [#allocation3], 0
    %s11 = scalar_lea.sflag [#allocation3], 1
    %12 = vsyncpa %s11, 0
    %13 = vsyncpa [#allocation6], 0
    %s14 = scalar_lea.sflag [#allocation6], 1
    %15 = vsyncpa %s14, 0
    %16 = vsyncpa [#allocation4], 0
    %s17 = scalar_lea.sflag [#allocation4], 1
    %18 = vsyncpa %s17, 0
    %19 = vsyncpa [#allocation10], 0
    %s20 = scalar_lea.sflag [#allocation10], 1
    %21 = vsyncpa %s20, 0
    loop: start=0, step=1, limit=4
    $region2: #{tpu_custom_call.1} parent=1 // loop_pre_header
      _
    $region3: #{tpu_custom_call.1} parent=1 // loop_header
      %s23 = sphi 0, %s27
      %p24 = scmp.ge.s32.totalorder %s23, 4
      %s30 = sphi 0, %s42
      %s31 = sphi 0, %s38
      %s32 = sphi 0, %s30
      %s33 = sphi 0, %s31
      %s34 = sphi 0, %s32
      %s35 = sphi 0, %s33
      %s45 = sphi 0, %s47
      %s48 = sphi 0, %s45
      %s49 = sphi 0, %s48
      %s65 = sphi 0, %s49
      %s73 = sphi 0, %s75
      %s76 = sphi 0, %s73
      %s77 = sphi 0, %s76
      %s93 = sphi 0, %s77
      %s101 = sphi 0, %s103
      %s104 = sphi 0, %s101
      %s105 = sphi 0, %s104
      %s121 = sphi 0, %s105
      %s129 = sphi 0, %s131
      %s132 = sphi 0, %s129
      %s133 = sphi 0, %s132
      %s149 = sphi 0, %s133
      %s157 = sphi 0, %s159
      %s160 = sphi 0, %s157
      %s161 = sphi 0, %s160
      %s177 = sphi 0, %s161
    $region4: #{tpu_custom_call.1} parent=1 // loop_header_branch
      %26 = sbr.rel (%p24) target = $region8
    $region5: #{tpu_custom_call.1} parent=1 // loop_body
      %s28 = ssub.s32 %s23, 1
      %s29 = ssub.s32 %s23, 2
      %s36 = sadd.s32 1, %s31
      %p37 = scmp.ge.s32.totalorder %s36, 1
      %s38 = scalar_select %p37, 0, %s36
      %s39 = sadd.s32 1, %s30
      %s40 = scalar_select %p37, %s39, %s30
      %p41 = scmp.ge.s32.totalorder %s40, 2
      %s42 = scalar_select %p41, 0, %s40
      %s43 = ssub.s32 %s30, %s42
      %p44 = scmp.eq.s32.totalorder %s43, 0
      %s46 = sadd.s32 %s45, 1
      %s47 = scalar_select %p44, %s45, %s46
      %p50 = pneg %p44
      %p51 = scmp.eq.s32.totalorder %s23, 1
      %p52 = por %p50, %p51
      %p53 = scmp.ne.s32.totalorder %s45, %s48
      %p54 = scmp.eq.s32.totalorder %s23, 0
      %p55 = por %p53, %p54
      %p56 = scmp.ne.s32.totalorder %s45, %s48
      %p57 = scmp.eq.s32.totalorder %s28, 1
      %p58 = por %p56, %p57
      %p59 = scmp.ne.s32.totalorder %s48, %s49
      %p60 = scmp.eq.s32.totalorder %s28, 0
      %p61 = por %p59, %p60
      %p62 = scmp.ne.s32.totalorder %s48, %s49
      %p63 = scmp.eq.s32.totalorder %s29, 1
      %p64 = por %p62, %p63
      %p66 = scmp.ne.s32.totalorder %s49, %s65
      %p67 = scmp.eq.s32.totalorder %s29, 0
      %p68 = por %p66, %p67
      %s69 = ssub.s32 %s30, %s42
      %s70 = ssub.s32 %s31, %s38
      %s71 = sor.u32 %s69, %s70
      %p72 = scmp.eq.s32.totalorder %s71, 0
      %s74 = sadd.s32 %s73, 1
      %s75 = scalar_select %p72, %s73, %s74
      %p78 = pneg %p72
      %p79 = scmp.eq.s32.totalorder %s23, 1
      %p80 = por %p78, %p79
      %p81 = scmp.ne.s32.totalorder %s73, %s76
      %p82 = scmp.eq.s32.totalorder %s23, 0
      %p83 = por %p81, %p82
      %p84 = scmp.ne.s32.totalorder %s73, %s76
      %p85 = scmp.eq.s32.totalorder %s28, 1
      %p86 = por %p84, %p85
      %p87 = scmp.ne.s32.totalorder %s76, %s77
      %p88 = scmp.eq.s32.totalorder %s28, 0
      %p89 = por %p87, %p88
      %p90 = scmp.ne.s32.totalorder %s76, %s77
      %p91 = scmp.eq.s32.totalorder %s29, 1
      %p92 = por %p90, %p91
      %p94 = scmp.ne.s32.totalorder %s77, %s93
      %p95 = scmp.eq.s32.totalorder %s29, 0
      %p96 = por %p94, %p95
      %s97 = ssub.s32 %s30, %s42
      %s98 = ssub.s32 %s31, %s38
      %s99 = sor.u32 %s97, %s98
      %p100 = scmp.eq.s32.totalorder %s99, 0
      %s102 = sadd.s32 %s101, 1
      %s103 = scalar_select %p100, %s101, %s102
      %p106 = pneg %p100
      %p107 = scmp.eq.s32.totalorder %s23, 1
      %p108 = por %p106, %p107
      %p109 = scmp.ne.s32.totalorder %s101, %s104
      %p110 = scmp.eq.s32.totalorder %s23, 0
      %p111 = por %p109, %p110
      %p112 = scmp.ne.s32.totalorder %s101, %s104
      %p113 = scmp.eq.s32.totalorder %s28, 1
      %p114 = por %p112, %p113
      %p115 = scmp.ne.s32.totalorder %s104, %s105
      %p116 = scmp.eq.s32.totalorder %s28, 0
      %p117 = por %p115, %p116
      %p118 = scmp.ne.s32.totalorder %s104, %s105
      %p119 = scmp.eq.s32.totalorder %s29, 1
      %p120 = por %p118, %p119
      %p122 = scmp.ne.s32.totalorder %s105, %s121
      %p123 = scmp.eq.s32.totalorder %s29, 0
      %p124 = por %p122, %p123
      %s125 = ssub.s32 %s30, %s42
      %s126 = ssub.s32 %s31, %s38
      %s127 = sor.u32 %s125, %s126
      %p128 = scmp.eq.s32.totalorder %s127, 0
      %s130 = sadd.s32 %s129, 1
      %s131 = scalar_select %p128, %s129, %s130
      %p134 = pneg %p128
      %p135 = scmp.eq.s32.totalorder %s23, 1
      %p136 = por %p134, %p135
      %p137 = scmp.ne.s32.totalorder %s129, %s132
      %p138 = scmp.eq.s32.totalorder %s23, 0
      %p139 = por %p137, %p138
      %p140 = scmp.ne.s32.totalorder %s129, %s132
      %p141 = scmp.eq.s32.totalorder %s28, 1
      %p142 = por %p140, %p141
      %p143 = scmp.ne.s32.totalorder %s132, %s133
      %p144 = scmp.eq.s32.totalorder %s28, 0
      %p145 = por %p143, %p144
      %p146 = scmp.ne.s32.totalorder %s132, %s133
      %p147 = scmp.eq.s32.totalorder %s29, 1
      %p148 = por %p146, %p147
      %p150 = scmp.ne.s32.totalorder %s133, %s149
      %p151 = scmp.eq.s32.totalorder %s29, 0
      %p152 = por %p150, %p151
      %s153 = ssub.s32 %s30, %s42
      %s154 = ssub.s32 %s31, %s38
      %s155 = sor.u32 %s153, %s154
      %p156 = scmp.eq.s32.totalorder %s155, 0
      %s158 = sadd.s32 %s157, 1
      %s159 = scalar_select %p156, %s157, %s158
      %p162 = pneg %p156
      %p163 = scmp.eq.s32.totalorder %s23, 1
      %p164 = por %p162, %p163
      %p165 = scmp.ne.s32.totalorder %s157, %s160
      %p166 = scmp.eq.s32.totalorder %s23, 0
      %p167 = por %p165, %p166
      %p168 = scmp.ne.s32.totalorder %s157, %s160
      %p169 = scmp.eq.s32.totalorder %s28, 1
      %p170 = por %p168, %p169
      %p171 = scmp.ne.s32.totalorder %s160, %s161
      %p172 = scmp.eq.s32.totalorder %s28, 0
      %p173 = por %p171, %p172
      %p174 = scmp.ne.s32.totalorder %s160, %s161
      %p175 = scmp.eq.s32.totalorder %s29, 1
      %p176 = por %p174, %p175
      %p178 = scmp.ne.s32.totalorder %s161, %s177
      %p179 = scmp.eq.s32.totalorder %s29, 0
      %p180 = por %p178, %p179
      %p181 = scmp.le.s32.totalorder 1, %s23
      %p182 = scmp.lt.s32.totalorder %s23, 3
      %p183 = pnand %p181, %p182
      %p184 = pneg %p183
      // Predicated region
      $region9: #{tpu_custom_call.1} parent=5 // pred_check
        _
      $region10: #{tpu_custom_call.1} parent=5 // pred_check_branch
        %186 = sbr.rel (%p183) target = $region12
      $region11: #{tpu_custom_call.1} parent=5 // pred_region
        %s187 = ssub.s32 %s23, 1
      $region12: #{tpu_custom_call.1} parent=5 // pred_fallthru
        _
      %p188 = scmp.lt.s32.totalorder %s23, 2
      // Predicated region
      $region13: #{tpu_custom_call.1} parent=5 // pred_check
        %p189 = pneg %p188
      $region14: #{tpu_custom_call.1} parent=5 // pred_check_branch
        %191 = sbr.rel (%p189) target = $region16
      $region15: #{tpu_custom_call.1} parent=5 // pred_region
        // Predicated region
        $region17: #{tpu_custom_call.1} parent=15 // pred_check
          %p192 = pneg %p55
        $region18: #{tpu_custom_call.1} parent=15 // pred_check_branch
          %194 = sbr.rel (%p192) target = $region20
        $region19: #{tpu_custom_call.1} parent=15 // pred_region
          %s195 = sand.u32 %s45, 1
          %s196 = scalar_lea.sflag [#allocation3], %s195
          %s197 = sand.u32 %s45, 1
          %s198 = smul.addr %s197, 8
          %s199 = scalar_lea.vmem [#allocation2], %s198
          %s201 = ssub.s32 128, 128
          %202 = vsyncadd %s196, %s201
          %s203 = smul.addr %s30, 128
          %s204 = scalar_lea.hbm %s0, %s203
          %s206 = sshll.u32 %s199, 4
          %s207 = int_to_ptr.vmem [resolvable:$true] %s206
          %209 = dma.hbm_to_vmem [thread:$0]  %s204, 128, %s207, %s196
        $region20: #{tpu_custom_call.1} parent=15 // pred_fallthru
          _
        // Predicated region
        $region21: #{tpu_custom_call.1} parent=15 // pred_check
          %p210 = pneg %p83
        $region22: #{tpu_custom_call.1} parent=15 // pred_check_branch
          %212 = sbr.rel (%p210) target = $region24
        $region23: #{tpu_custom_call.1} parent=15 // pred_region
          %s213 = sand.u32 %s23, 1
          %s214 = scalar_lea.sflag [#allocation6], %s213
          %s215 = sand.u32 %s73, 1
          %s216 = smul.addr %s215, 8
          %s217 = scalar_lea.vmem [#allocation5], %s216
          %s219 = ssub.s32 128, 128
          %220 = vsyncadd %s214, %s219
          %s221 = sadd.s32 %s31, %s30
          %s222 = smul.addr %s221, 128
          %s223 = scalar_lea.hbm %s1, %s222
          %s225 = sshll.u32 %s217, 4
          %s226 = int_to_ptr.vmem [resolvable:$true] %s225
          %228 = dma.hbm_to_vmem [thread:$0]  %s223, 128, %s226, %s214
        $region24: #{tpu_custom_call.1} parent=15 // pred_fallthru
          _
        // Predicated region
        $region25: #{tpu_custom_call.1} parent=15 // pred_check
          %p229 = pneg %p111
        $region26: #{tpu_custom_call.1} parent=15 // pred_check_branch
          %231 = sbr.rel (%p229) target = $region28
        $region27: #{tpu_custom_call.1} parent=15 // pred_region
          %s232 = sand.u32 %s23, 1
          %s233 = scalar_lea.sflag [#allocation6], %s232
          %s234 = sand.u32 %s101, 1
          %s235 = scalar_lea.vmem [#allocation7], %s234
          %s237 = ssub.s32 16, 16
          %238 = vsyncadd %s233, %s237
          %s239 = sadd.s32 %s31, %s30
          %s240 = smul.addr %s239, 16
          %s241 = scalar_lea.hbm %s2, %s240
          %s243 = sshll.u32 %s235, 4
          %s244 = int_to_ptr.vmem [resolvable:$true] %s243
          %246 = dma.hbm_to_vmem [thread:$0]  %s241, 16, %s244, %s233
        $region28: #{tpu_custom_call.1} parent=15 // pred_fallthru
          _
      $region16: #{tpu_custom_call.1} parent=5 // pred_fallthru
        _
      %p247 = scmp.le.s32.totalorder 1, %s23
      %p248 = scmp.lt.s32.totalorder %s23, 3
      %p249 = pnand %p247, %p248
      %p250 = pneg %p249
      // Predicated region
      $region29: #{tpu_custom_call.1} parent=5 // pred_check
        _
      $region30: #{tpu_custom_call.1} parent=5 // pred_check_branch
        %252 = sbr.rel (%p249) target = $region32
      $region31: #{tpu_custom_call.1} parent=5 // pred_region
        %s253 = ssub.s32 %s23, 1
        %s254 = sand.u32 %s48, 1
        %s255 = scalar_lea.sflag [#allocation3], %s254
        %s256 = sand.u32 %s48, 1
        %s257 = smul.addr %s256, 8
        %s258 = scalar_lea.vmem [#allocation2], %s257
        // Predicated region
        $region33: #{tpu_custom_call.1} parent=31 // pred_check
          %p259 = pneg %p61
        $region34: #{tpu_custom_call.1} parent=31 // pred_check_branch
          %261 = sbr.rel (%p259) target = $region36
        $region35: #{tpu_custom_call.1} parent=31 // pred_region
          %262 = dma.done %s255, 128
        $region36: #{tpu_custom_call.1} parent=31 // pred_fallthru
          _
        %s263 = sand.u32 %s28, 1
        %s264 = scalar_lea.sflag [#allocation6], %s263
        %s265 = sand.u32 %s76, 1
        %s266 = smul.addr %s265, 8
        %s267 = scalar_lea.vmem [#allocation5], %s266
        // Predicated region
        $region37: #{tpu_custom_call.1} parent=31 // pred_check
          %p268 = pneg %p89
        $region38: #{tpu_custom_call.1} parent=31 // pred_check_branch
          %270 = sbr.rel (%p268) target = $region40
        $region39: #{tpu_custom_call.1} parent=31 // pred_region
          %271 = dma.done %s264, 128
        $region40: #{tpu_custom_call.1} parent=31 // pred_fallthru
          _
        %s272 = sand.u32 %s28, 1
        %s273 = scalar_lea.sflag [#allocation6], %s272
        %s274 = sand.u32 %s104, 1
        %s275 = scalar_lea.vmem [#allocation7], %s274
        // Predicated region
        $region41: #{tpu_custom_call.1} parent=31 // pred_check
          %p276 = pneg %p117
        $region42: #{tpu_custom_call.1} parent=31 // pred_check_branch
          %278 = sbr.rel (%p276) target = $region44
        $region43: #{tpu_custom_call.1} parent=31 // pred_region
          %279 = dma.done %s273, 16
        $region44: #{tpu_custom_call.1} parent=31 // pred_fallthru
          _
        %s280 = sand.u32 %s48, 1
        %s281 = scalar_lea.sflag [#allocation3], %s280
        %s282 = sand.u32 %s48, 1
        %s283 = smul.addr %s282, 8
        %s284 = scalar_lea.vmem [#allocation2], %s283
        %p285 = pneg %p61
        %p286 = pneg %p58
        %s287 = sand.u32 %s28, 1
        %s288 = scalar_lea.sflag [#allocation6], %s287
        %s289 = sand.u32 %s76, 1
        %s290 = smul.addr %s289, 8
        %s291 = scalar_lea.vmem [#allocation5], %s290
        %p292 = pneg %p89
        %p293 = pneg %p86
        %s294 = sand.u32 %s28, 1
        %s295 = scalar_lea.sflag [#allocation6], %s294
        %s296 = sand.u32 %s104, 1
        %s297 = scalar_lea.vmem [#allocation7], %s296
        %p298 = pneg %p117
        %p299 = pneg %p114
        %p300 = pneg %p145
        %p301 = pneg %p142
        %s302 = sand.u32 %s132, 1
        %s303 = scalar_lea.sflag [#allocation4], %s302
        %s304 = sand.u32 %s132, 1
        %s305 = smul.addr %s304, 4
        %s306 = scalar_lea.vmem [#allocation8], %s305
        %p307 = pneg %p173
        %p308 = pneg %p170
        %s309 = sand.u32 %s160, 1
        %s310 = scalar_lea.sflag [#allocation10], %s309
        %s311 = sand.u32 %s160, 1
        %s312 = smul.addr %s311, 4
        %s313 = scalar_lea.vmem [#allocation9], %s312
        %v314 = vld [vmem:[%s258] sm:$0x1f]
        %v315 = vld [vmem:[%s267] sm:$0x1f]
        %v316 = vld [vmem:[%s275] sm:$0x1]
        %v318 = vlaneseq
        %v319 = vshrl.u32 %v318, 7
        %v320 = vsub.s32 0, %v319
        %v321 = vrot.slane %v316, %v320
        %323 = vxpose.xlu0.b32.start [1/16] %v314, 128
        %324 = vxpose.xlu0.b32.cont [2/16] 0.0, 128
        %325 = vxpose.xlu0.b32.cont [3/16] 0.0, 128
        %326 = vxpose.xlu0.b32.cont [4/16] 0.0, 128
        %327 = vxpose.xlu0.b32.cont [5/16] 0.0, 128
        %328 = vxpose.xlu0.b32.cont [6/16] 0.0, 128
        %329 = vxpose.xlu0.b32.cont [7/16] 0.0, 128
        %330 = vxpose.xlu0.b32.cont [8/16] 0.0, 128
        %331 = vxpose.xlu0.b32.cont [9/16] 0.0, 128
        %332 = vxpose.xlu0.b32.cont [10/16] 0.0, 128
        %333 = vxpose.xlu0.b32.cont [11/16] 0.0, 128
        %334 = vxpose.xlu0.b32.cont [12/16] 0.0, 128
        %335 = vxpose.xlu0.b32.cont [13/16] 0.0, 128
        %336 = vxpose.xlu0.b32.cont [14/16] 0.0, 128
        %337 = vxpose.xlu0.b32.cont [15/16] 0.0, 128
        %338 = vxpose.xlu0.b32.end [16/16] 0.0, 128
        %v339 = vpop.trf.xlu0
        %v340 = vpop.trf.xlu0
        %v341 = vpop.trf.xlu0
        %v342 = vpop.trf.xlu0
        %v343 = vpop.trf.xlu0
        %v344 = vpop.trf.xlu0
        %v345 = vpop.trf.xlu0
        %v346 = vpop.trf.xlu0
        %v347 = vpop.trf.xlu0
        %v348 = vpop.trf.xlu0
        %v349 = vpop.trf.xlu0
        %v350 = vpop.trf.xlu0
        %v351 = vpop.trf.xlu0
        %v352 = vpop.trf.xlu0
        %v353 = vpop.trf.xlu0
        %v354 = vpop.trf.xlu0
        %vm355 = vcmask 39936
        %v357 = vsel %vm355, %v339, 0
        %v360 = vsel %vm355, %v340, 0
        %vm362 = vcmask 1044480
        %v364 = vsel %vm362, %v315, 0
        %366 = vmatprep.subr.mxu0 0.0
        %367 = vmatpush1.msra.mxu0 %v364
        %368 = vmatprep.subr.mxu0 0.0
        %369 = vmatpush1.msra.mxu0 0.0
        %370 = vmatprep.subr.mxu0 0.0
        %371 = vmatpush1.msra.mxu0 0.0
        %372 = vmatprep.subr.mxu0 0.0
        %373 = vmatpush1.msra.mxu0 0.0
        %374 = vmatprep.subr.mxu0 0.0
        %375 = vmatpush1.msra.mxu0 0.0
        %376 = vmatprep.subr.mxu0 0.0
        %377 = vmatpush1.msra.mxu0 0.0
        %378 = vmatprep.subr.mxu0 0.0
        %379 = vmatpush1.msra.mxu0 0.0
        %380 = vmatprep.subr.mxu0 0.0
        %381 = vmatpush1.msra.mxu0 0.0
        %382 = vmatprep.subr.mxu0 0.0
        %383 = vmatpush1.msra.mxu0 0.0
        %384 = vmatprep.subr.mxu0 0.0
        %385 = vmatpush1.msra.mxu0 0.0
        %386 = vmatprep.subr.mxu0 0.0
        %387 = vmatpush1.msra.mxu0 0.0
        %388 = vmatprep.subr.mxu0 0.0
        %389 = vmatpush1.msra.mxu0 0.0
        %390 = vmatprep.subr.mxu0 0.0
        %391 = vmatpush1.msra.mxu0 0.0
        %392 = vmatprep.subr.mxu0 0.0
        %393 = vmatpush1.msra.mxu0 0.0
        %394 = vmatprep.subr.mxu0 0.0
        %395 = vmatpush1.msra.mxu0 0.0
        %396 = vmatprep.subr.mxu0 0.0
        %397 = vmatpush1.msra.mxu0 0.0
        %398 = vmatprep.subr.mxu0 0.0
        %399 = vmatpush1.msra.mxu0 0.0
        %400 = vmatprep.subr.mxu0 0.0
        %401 = vmatpush1.msra.mxu0 0.0
        %402 = vmatprep.subr.mxu0 0.0
        %403 = vmatpush1.msra.mxu0 0.0
        %404 = vmatprep.subr.mxu0 0.0
        %405 = vmatpush1.msra.mxu0 0.0
        %406 = vmatprep.subr.mxu0 0.0
        %407 = vmatpush1.msra.mxu0 0.0
        %408 = vmatprep.subr.mxu0 0.0
        %409 = vmatpush1.msra.mxu0 0.0
        %410 = vmatprep.subr.mxu0 0.0
        %411 = vmatpush1.msra.mxu0 0.0
        %412 = vmatprep.subr.mxu0 0.0
        %413 = vmatpush1.msra.mxu0 0.0
        %414 = vmatprep.subr.mxu0 0.0
        %415 = vmatpush1.msra.mxu0 0.0
        %416 = vmatprep.subr.mxu0 0.0
        %417 = vmatpush1.msra.mxu0 0.0
        %418 = vmatprep.subr.mxu0 0.0
        %419 = vmatpush1.msra.mxu0 0.0
        %420 = vmatprep.subr.mxu0 0.0
        %421 = vmatpush1.msra.mxu0 0.0
        %422 = vmatprep.subr.mxu0 0.0
        %423 = vmatpush1.msra.mxu0 0.0
        %424 = vmatprep.subr.mxu0 0.0
        %425 = vmatpush1.msra.mxu0 0.0
        %426 = vmatprep.subr.mxu0 0.0
        %427 = vmatpush1.msra.mxu0 0.0
        %428 = vmatprep.subr.mxu0 0.0
        %429 = vmatpush1.msra.mxu0 0.0
        %430 = vmatprep.mubr.f32.mxu0 0.0
        %431 = vmatmul.mubr.f32.gmra.mrb[0].mxu0 %v357
        %v432 = vpop.f32.mrb[0].mxu0
        %v433 = vadd.f32 %v321, %v432
        %v434 = vpop.f32.mrb[0].mxu0
        %435 = vmatprep.mubr.f32.mxu0 0.0
        %436 = vmatmul.mubr.f32.gmra.mrb[0].mxu0 %v360
        %v437 = vpop.f32.mrb[0].mxu0
        %v438 = vadd.f32 %v321, %v437
        %v439 = vpop.f32.mrb[0].mxu0
        %440 = vdwg.mxu0
        %v441 = vmax.f32 %v433, 0.0
        %v442 = vmax.f32 %v438, 0.0
        %v443 = vlaneseq
        %v444 = vshrl.u32 %v443, 7
        %v445 = vadd.s32 %v444, 8
        %v448 = vand.u32 %v441, 4294967280
        %v449 = vand.u32 %v442, 4294967280
        %v450 = vor.u32 %v448, %v444
        %v451 = vor.u32 %v449, %v445
        %vm452 = vcmp.lt.s32.totalorder %v450, %v451
        %v453 = vsel %vm452, %v450, %v451
        %v454 = vrot.slane %v453, 4
        %vm455 = vcmp.lt.s32.totalorder %v453, %v454
        %v456 = vsel %vm455, %v453, %v454
        %v457 = vrot.slane %v456, 2
        %vm458 = vcmp.lt.s32.totalorder %v456, %v457
        %v459 = vsel %vm458, %v456, %v457
        %v460 = vrot.slane %v459, 1
        %vm461 = vcmp.lt.s32.totalorder %v459, %v460
        %v462 = vsel %vm461, %v459, %v460
        %vm463 = vcmp.eq.s32.totalorder %v450, %v462
        %vm464 = vcmp.eq.s32.totalorder %v451, %v462
        %v465 = vsel %vm463, %v441, inf
        %v466 = vsel %vm464, %v442, inf
        %v467 = vmin.f32 %v465, %v466
        %v468 = vrot.slane %v467, 4
        %v469 = vmin.f32 %v467, %v468
        %v470 = vrot.slane %v469, 2
        %v471 = vmin.f32 %v469, %v470
        %v472 = vrot.slane %v471, 1
        %v473 = vmin.f32 %v471, %v472
        %v474 = vand.u32 %v462, 15
        %475 = vst [vmem:[%s313] sm:$0x1] %v474
        %v476 = vrsqrt.pop %v473
        %v477 = vmul.f32 %v473, %v476
        %vm478 = vcmp.eq.f32.partialorder %v473, inf
        %v479 = vsel %vm478, %v473, %v477
        %vm480 = vcmp.eq.f32.partialorder %v473, 0.0
        %v481 = vand.u32 %v473, 2147483648
        %v482 = vsel %vm480, %v481, %v479
        %483 = vst [vmem:[%s306] sm:$0x1] %v482
        %v484 = vsel %vm463, 2147483647, %v450
        %v485 = vsel %vm464, 2147483647, %v451
        %vm486 = vcmp.lt.s32.totalorder %v484, %v485
        %v487 = vsel %vm486, %v484, %v485
        %v488 = vrot.slane %v487, 4
        %vm489 = vcmp.lt.s32.totalorder %v487, %v488
        %v490 = vsel %vm489, %v487, %v488
        %v491 = vrot.slane %v490, 2
        %vm492 = vcmp.lt.s32.totalorder %v490, %v491
        %v493 = vsel %vm492, %v490, %v491
        %v494 = vrot.slane %v493, 1
        %vm495 = vcmp.lt.s32.totalorder %v493, %v494
        %v496 = vsel %vm495, %v493, %v494
        %vm497 = vcmp.eq.s32.totalorder %v484, %v496
        %vm498 = vcmp.eq.s32.totalorder %v485, %v496
        %v499 = vsel %vm497, %v441, inf
        %v500 = vsel %vm498, %v442, inf
        %v501 = vmin.f32 %v499, %v500
        %v502 = vrot.slane %v501, 4
        %v503 = vmin.f32 %v501, %v502
        %v504 = vrot.slane %v503, 2
        %v505 = vmin.f32 %v503, %v504
        %v506 = vrot.slane %v505, 1
        %v507 = vmin.f32 %v505, %v506
        %v508 = vand.u32 %v496, 15
        %509 = vst [vmem:[%s313 + $0x1] sm:$0x1] %v508
        %v510 = vrsqrt.pop %v507
        %v511 = vmul.f32 %v507, %v510
        %vm512 = vcmp.eq.f32.partialorder %v507, inf
        %v513 = vsel %vm512, %v507, %v511
        %vm514 = vcmp.eq.f32.partialorder %v507, 0.0
        %v515 = vand.u32 %v507, 2147483648
        %v516 = vsel %vm514, %v515, %v513
        %517 = vst [vmem:[%s306 + $0x1] sm:$0x1] %v516
        %v518 = vsel %vm497, 2147483647, %v484
        %v519 = vsel %vm498, 2147483647, %v485
        %vm520 = vcmp.lt.s32.totalorder %v518, %v519
        %v521 = vsel %vm520, %v518, %v519
        %v522 = vrot.slane %v521, 4
        %vm523 = vcmp.lt.s32.totalorder %v521, %v522
        %v524 = vsel %vm523, %v521, %v522
        %v525 = vrot.slane %v524, 2
        %vm526 = vcmp.lt.s32.totalorder %v524, %v525
        %v527 = vsel %vm526, %v524, %v525
        %v528 = vrot.slane %v527, 1
        %vm529 = vcmp.lt.s32.totalorder %v527, %v528
        %v530 = vsel %vm529, %v527, %v528
        %vm531 = vcmp.eq.s32.totalorder %v518, %v530
        %vm532 = vcmp.eq.s32.totalorder %v519, %v530
        %v533 = vsel %vm531, %v441, inf
        %v534 = vsel %vm532, %v442, inf
        %v535 = vmin.f32 %v533, %v534
        %v536 = vrot.slane %v535, 4
        %v537 = vmin.f32 %v535, %v536
        %v538 = vrot.slane %v537, 2
        %v539 = vmin.f32 %v537, %v538
        %v540 = vrot.slane %v539, 1
        %v541 = vmin.f32 %v539, %v540
        %v542 = vand.u32 %v530, 15
        %543 = vst [vmem:[%s313 + $0x2] sm:$0x1] %v542
        %v544 = vrsqrt.pop %v541
        %v545 = vmul.f32 %v541, %v544
        %vm546 = vcmp.eq.f32.partialorder %v541, inf
        %v547 = vsel %vm546, %v541, %v545
        %vm548 = vcmp.eq.f32.partialorder %v541, 0.0
        %v549 = vand.u32 %v541, 2147483648
        %v550 = vsel %vm548, %v549, %v547
        %551 = vst [vmem:[%s306 + $0x2] sm:$0x1] %v550
        %v552 = vsel %vm531, 2147483647, %v518
        %v553 = vsel %vm532, 2147483647, %v519
        %vm554 = vcmp.lt.s32.totalorder %v552, %v553
        %v555 = vsel %vm554, %v552, %v553
        %v556 = vrot.slane %v555, 4
        %vm557 = vcmp.lt.s32.totalorder %v555, %v556
        %v558 = vsel %vm557, %v555, %v556
        %v559 = vrot.slane %v558, 2
        %vm560 = vcmp.lt.s32.totalorder %v558, %v559
        %v561 = vsel %vm560, %v558, %v559
        %v562 = vrot.slane %v561, 1
        %vm563 = vcmp.lt.s32.totalorder %v561, %v562
        %v564 = vsel %vm563, %v561, %v562
        %vm565 = vcmp.eq.s32.totalorder %v552, %v564
        %vm566 = vcmp.eq.s32.totalorder %v553, %v564
        %v567 = vsel %vm565, %v441, inf
        %v568 = vsel %vm566, %v442, inf
        %v569 = vmin.f32 %v567, %v568
        %v570 = vrot.slane %v569, 4
        %v571 = vmin.f32 %v569, %v570
        %v572 = vrot.slane %v571, 2
        %v573 = vmin.f32 %v571, %v572
        %v574 = vrot.slane %v573, 1
        %v575 = vmin.f32 %v573, %v574
        %v576 = vand.u32 %v564, 15
        %577 = vst [vmem:[%s313 + $0x3] sm:$0x1] %v576
        %v578 = vrsqrt.pop %v575
        %v579 = vmul.f32 %v575, %v578
        %vm580 = vcmp.eq.f32.partialorder %v575, inf
        %v581 = vsel %vm580, %v575, %v579
        %vm582 = vcmp.eq.f32.partialorder %v575, 0.0
        %v583 = vand.u32 %v575, 2147483648
        %v584 = vsel %vm582, %v583, %v581
        %585 = vst [vmem:[%s306 + $0x3] sm:$0x1] %v584
        %s586 = sand.u32 %s132, 1
        %s587 = scalar_lea.sflag [#allocation4], %s586
        %s588 = sand.u32 %s132, 1
        %s589 = smul.addr %s588, 4
        %s590 = scalar_lea.vmem [#allocation8], %s589
        %s591 = sand.u32 %s160, 1
        %s592 = scalar_lea.sflag [#allocation10], %s591
        %s593 = sand.u32 %s160, 1
        %s594 = smul.addr %s593, 4
        %s595 = scalar_lea.vmem [#allocation9], %s594
        // Predicated region
        $region45: #{tpu_custom_call.1} parent=31 // pred_check
          %p596 = pneg %p142
        $region46: #{tpu_custom_call.1} parent=31 // pred_check_branch
          %598 = sbr.rel (%p596) target = $region48
        $region47: #{tpu_custom_call.1} parent=31 // pred_region
          %s600 = ssub.s32 64, 64
          %601 = vsyncadd %s587, %s600
          %s602 = sadd.s32 %s33, %s32
          %s603 = smul.addr %s602, 64
          %s604 = scalar_lea.hbm %s3, %s603
          %s606 = sshll.u32 %s590, 4
          %s607 = int_to_ptr.vmem [resolvable:$true] %s606
          %609 = dma.vmem_to_hbm [thread:$0]  %s607, 64, %s604, %s587
        $region48: #{tpu_custom_call.1} parent=31 // pred_fallthru
          _
        // Predicated region
        $region49: #{tpu_custom_call.1} parent=31 // pred_check
          %p610 = pneg %p170
        $region50: #{tpu_custom_call.1} parent=31 // pred_check_branch
          %612 = sbr.rel (%p610) target = $region52
        $region51: #{tpu_custom_call.1} parent=31 // pred_region
          %s614 = ssub.s32 64, 64
          %615 = vsyncadd %s592, %s614
          %s616 = sadd.s32 %s33, %s32
          %s617 = smul.addr %s616, 64
          %s618 = scalar_lea.hbm %s4, %s617
          %s620 = sshll.u32 %s595, 4
          %s621 = int_to_ptr.vmem [resolvable:$true] %s620
          %623 = dma.vmem_to_hbm [thread:$0]  %s621, 64, %s618, %s592
        $region52: #{tpu_custom_call.1} parent=31 // pred_fallthru
          _
      $region32: #{tpu_custom_call.1} parent=5 // pred_fallthru
        _
      %p624 = scmp.le.s32.totalorder 2, %s23
      // Predicated region
      $region53: #{tpu_custom_call.1} parent=5 // pred_check
        %p625 = pneg %p624
      $region54: #{tpu_custom_call.1} parent=5 // pred_check_branch
        %627 = sbr.rel (%p625) target = $region56
      $region55: #{tpu_custom_call.1} parent=5 // pred_region
        %s628 = ssub.s32 %s23, 2
        // Predicated region
        $region57: #{tpu_custom_call.1} parent=55 // pred_check
          %p629 = pneg %p148
        $region58: #{tpu_custom_call.1} parent=55 // pred_check_branch
          %631 = sbr.rel (%p629) target = $region60
        $region59: #{tpu_custom_call.1} parent=55 // pred_region
          %s632 = sand.u32 %s133, 1
          %s633 = scalar_lea.sflag [#allocation4], %s632
          %s634 = sand.u32 %s133, 1
          %s635 = smul.addr %s634, 4
          %s636 = scalar_lea.vmem [#allocation8], %s635
          %637 = dma.done %s633, 64
        $region60: #{tpu_custom_call.1} parent=55 // pred_fallthru
          _
        // Predicated region
        $region61: #{tpu_custom_call.1} parent=55 // pred_check
          %p638 = pneg %p176
        $region62: #{tpu_custom_call.1} parent=55 // pred_check_branch
          %640 = sbr.rel (%p638) target = $region64
        $region63: #{tpu_custom_call.1} parent=55 // pred_region
          %s641 = sand.u32 %s161, 1
          %s642 = scalar_lea.sflag [#allocation10], %s641
          %s643 = sand.u32 %s161, 1
          %s644 = smul.addr %s643, 4
          %s645 = scalar_lea.vmem [#allocation9], %s644
          %646 = dma.done %s642, 64
        $region64: #{tpu_custom_call.1} parent=55 // pred_fallthru
          _
      $region56: #{tpu_custom_call.1} parent=5 // pred_fallthru
        _
    $region6: #{tpu_custom_call.1} parent=1 // loop_footer
      %s27 = sadd.s32 1, %s23
    $region7: #{tpu_custom_call.1} parent=1 // loop_footer_branch
      %22 = sbr.rel target = $region3
    $region8: #{tpu_custom_call.1} parent=1 // loop_exit
      _
    %647 = vsyncpa [#allocation3], 1
    %s648 = scalar_lea.sflag [#allocation3], 1
    %649 = vsyncpa %s648, 1
    %650 = vsyncpa [#allocation6], 1
    %s651 = scalar_lea.sflag [#allocation6], 1
    %652 = vsyncpa %s651, 1
    %653 = vsyncpa [#allocation4], 1
    %s654 = scalar_lea.sflag [#allocation4], 1
    %655 = vsyncpa %s654, 1
    %656 = vsyncpa [#allocation10], 1
    %s657 = scalar_lea.sflag [#allocation10], 1
    %658 = vsyncpa %s657, 1

</llo_original>
